<compile_context>
chip_gen: v7x
topology: tpu7x:2x2x1
jax: 0.10.0
libtpu: 0.0.40
codegen_flags: <defaults>
</compile_context>

<pallas_src>
import jax
import jax.numpy as jnp
from jax.experimental import pallas as pl
from jax.experimental.pallas import tpu as pltpu

EPS = 1e-6
LANES = 128
MAX_BLOCK_ROWS = 1024   # (1024, 128) f32 tile = 512 KiB; 2 in x 2 bufs = 2 MiB
NUM_CORES = 2           # megacore split on v7x; plain sequential loop elsewhere


def _charbonnier_kernel(n_ref, x_ref, y_ref, o_ref, acc_ref):
    c = pl.program_id(0)
    i = pl.program_id(1)
    nsteps = pl.num_programs(1)

    # Reset the per-core vector accumulator at the start of its row range.
    @pl.when(i == 0)
    def _():
        acc_ref[...] = jnp.zeros_like(acc_ref)

    blk_rows, lanes = acc_ref.shape

    # Global (unclamped) block index this (core, step) owns.  Ghost blocks past
    # the end of the data are clamped to a real block by the index_map, but
    # their global element indices fall past n so the mask zeroes them out.
    blk = c * nsteps + i
    row0 = blk * blk_rows
    rid = jax.lax.broadcasted_iota(jnp.int32, (blk_rows, lanes), 0)
    cid = jax.lax.broadcasted_iota(jnp.int32, (blk_rows, lanes), 1)
    gidx = (row0 + rid) * lanes + cid
    valid = gidx < n_ref[0]

    d = x_ref[...].astype(jnp.float32) - y_ref[...].astype(jnp.float32)
    err = jnp.sqrt(d * d + jnp.float32(EPS))
    acc_ref[...] += jnp.where(valid, err, 0.0)

    # Single cross-lane/sublane reduction + scalar store per core.
    @pl.when(i == nsteps - 1)
    def _():
        o_ref[...] = jnp.sum(acc_ref[...]).reshape(1, 1, 1)


def l1_charbonnier_loss(x, y):
    """mean(sqrt((x - y)^2 + eps)) over all elements, like the PyTorch module."""
    assert x.shape == y.shape
    n = x.size

    # Keep native dtypes -> no extra HBM pass for sub-32-bit inputs.
    xf = jnp.ravel(x)
    yf = jnp.ravel(y)

    # Sublane packing requirement of the narrowest dtype (f32->8, bf16->16, i8->32).
    min_item = min(jnp.dtype(x.dtype).itemsize, jnp.dtype(y.dtype).itemsize)
    sublanes = 8 * max(1, 4 // max(1, min_item))
    unit = sublanes * LANES

    # Pad only up to one (sublanes, 128) tile so the flat array reshapes cleanly;
    # padded elements are masked inside the kernel (no eps correction needed).
    n_pad = (-n) % unit
    if n_pad:
        xf = jnp.pad(xf, (0, n_pad))
        yf = jnp.pad(yf, (0, n_pad))
    rows = (n + n_pad) // LANES

    block_rows = min(MAX_BLOCK_ROWS, rows)   # rows is a multiple of `sublanes`
    nblocks = pl.cdiv(rows, block_rows)
    bpc = pl.cdiv(nblocks, NUM_CORES)        # blocks per core (grid axis 1)

    x2 = xf.reshape(rows, LANES)
    y2 = yf.reshape(rows, LANES)
    n_arr = jnp.array([n], dtype=jnp.int32)

    def in_map(c, i, n_smem):
        # Clamp so ghost blocks never DMA out of bounds; kernel masks them.
        return (jnp.minimum(c * bpc + i, nblocks - 1), 0)

    partials = pl.pallas_call(
        _charbonnier_kernel,
        out_shape=jax.ShapeDtypeStruct((NUM_CORES, 1, 1), jnp.float32),
        grid_spec=pltpu.PrefetchScalarGridSpec(
            num_scalar_prefetch=1,
            grid=(NUM_CORES, bpc),
            in_specs=[
                pl.BlockSpec((block_rows, LANES), in_map),
                pl.BlockSpec((block_rows, LANES), in_map),
            ],
            out_specs=pl.BlockSpec((1, 1, 1), lambda c, i, n_smem: (c, 0, 0)),
            scratch_shapes=[pltpu.VMEM((block_rows, LANES), jnp.float32)],
        ),
        compiler_params=pltpu.CompilerParams(
            dimension_semantics=("parallel", "arbitrary"),
        ),
    )(n_arr, x2, y2)

    return jnp.sum(partials) / jnp.float32(n)


if __name__ == "__main__":
    key = jax.random.PRNGKey(0)
    kx, ky = jax.random.split(key)
    # NCHW, small shapes: batch=2, channels=4, spatial=16x16
    X = jax.random.normal(kx, (2, 4, 16, 16), dtype=jnp.float32)
    Y = jax.random.normal(ky, (2, 4, 16, 16), dtype=jnp.float32)

    loss = l1_charbonnier_loss(X, Y)
    jax.block_until_ready(loss)

    # Reference check in plain JAX
    diff = X - Y
    ref = jnp.mean(jnp.sqrt(diff * diff + EPS))
    assert jnp.allclose(loss, ref, rtol=1e-5, atol=1e-6), (loss, ref)

    print("KERNEL_OK")
</pallas_src>

<mosaic_0001>
module attributes {stable_mosaic.version = 11 : i64} {
  func.func @_charbonnier_kernel(%arg0: i32, %arg1: i32, %arg2: memref<1xi32, #tpu.memory_space<smem>>, %arg3: memref<16x128xf32, #tpu.memory_space<vmem>>, %arg4: memref<16x128xf32, #tpu.memory_space<vmem>>, %arg5: memref<1x1x1xf32, #tpu.memory_space<vmem>>, %arg6: memref<16x128xf32, #tpu.memory_space<vmem>>) attributes {dimension_semantics = [#tpu.dimension_semantics<parallel>, #tpu.dimension_semantics<arbitrary>], iteration_bounds = array<i64: 2, 1>, scalar_prefetch = 1 : i64, scratch_operands = 1 : i64, tpu.core_type = #tpu.core_type<tc>, window_params = [{transform_indices = @transform_0, window_bounds = array<i64: 16, 128>}, {transform_indices = @transform_1, window_bounds = array<i64: 16, 128>}, {transform_indices = @transform_2, window_bounds = array<i64: 1, 1, 1>}]} {
    %c0_i32 = arith.constant 0 : i32
    %0 = arith.cmpi eq, %arg1, %c0_i32 : i32
    %1 = arith.extui %0 : i1 to i32
    %c0_i32_0 = arith.constant 0 : i32
    %2 = arith.cmpi ne, %1, %c0_i32_0 : i32
    scf.if %2 {
      %cst_12 = arith.constant 0.000000e+00 : f32
      %31 = vector.broadcast %cst_12 : f32 to vector<16x128xf32>
      %c0_13 = arith.constant 0 : index
      %c0_14 = arith.constant 0 : index
      %32 = vector.load %arg6[%c0_13, %c0_14] : memref<16x128xf32, #tpu.memory_space<vmem>>, vector<16x128xf32>
      tpu.vector_store %arg6[%c0_13, %c0_14], %31 {strides = array<i32>} : memref<16x128xf32, #tpu.memory_space<vmem>>, vector<16x128xf32>,
    } else {
    }
    %c1_i32 = arith.constant 1 : i32
    %3 = arith.muli %arg0, %c1_i32 : i32
    %4 = arith.addi %3, %arg1 : i32
    %c16_i32 = arith.constant 16 : i32
    %5 = arith.muli %4, %c16_i32 : i32
    %6 = tpu.iota {dimensions = array<i32: 0>} : vector<16x128xi32>
    %7 = tpu.iota {dimensions = array<i32: 1>} : vector<16x128xi32>
    %8 = vector.broadcast %5 : i32 to vector<16x128xi32>
    %9 = arith.addi %8, %6 : vector<16x128xi32>
    %c128_i32 = arith.constant 128 : i32
    %10 = vector.broadcast %c128_i32 : i32 to vector<16x128xi32>
    %11 = arith.muli %9, %10 : vector<16x128xi32>
    %12 = arith.addi %11, %7 : vector<16x128xi32>
    %c0 = arith.constant 0 : index
    %13 = memref.load %arg2[%c0] : memref<1xi32, #tpu.memory_space<smem>>
    %14 = vector.broadcast %13 : i32 to vector<16x128xi32>
    %15 = arith.cmpi slt, %12, %14 : vector<16x128xi32>
    %c0_1 = arith.constant 0 : index
    %c0_2 = arith.constant 0 : index
    %16 = vector.load %arg3[%c0_1, %c0_2] : memref<16x128xf32, #tpu.memory_space<vmem>>, vector<16x128xf32>
    %c0_3 = arith.constant 0 : index
    %c0_4 = arith.constant 0 : index
    %17 = vector.load %arg4[%c0_3, %c0_4] : memref<16x128xf32, #tpu.memory_space<vmem>>, vector<16x128xf32>
    %18 = arith.subf %16, %17 : vector<16x128xf32>
    %19 = arith.mulf %18, %18 : vector<16x128xf32>
    %cst = arith.constant 9.99999997E-7 : f32
    %20 = vector.broadcast %cst : f32 to vector<16x128xf32>
    %21 = arith.addf %19, %20 : vector<16x128xf32>
    %22 = math.sqrt %21 : vector<16x128xf32>
    %c0_5 = arith.constant 0 : index
    %c0_6 = arith.constant 0 : index
    %23 = vector.load %arg6[%c0_5, %c0_6] : memref<16x128xf32, #tpu.memory_space<vmem>>, vector<16x128xf32>
    %cst_7 = arith.constant 0.000000e+00 : f32
    %24 = vector.broadcast %cst_7 : f32 to vector<16x128xf32>
    %25 = arith.select %15, %22, %24 : vector<16x128xi1>, vector<16x128xf32>
    %26 = arith.addf %23, %25 : vector<16x128xf32>
    %c0_8 = arith.constant 0 : index
    %c0_9 = arith.constant 0 : index
    %27 = vector.load %arg6[%c0_8, %c0_9] : memref<16x128xf32, #tpu.memory_space<vmem>>, vector<16x128xf32>
    tpu.vector_store %arg6[%c0_8, %c0_9], %26 {strides = array<i32>} : memref<16x128xf32, #tpu.memory_space<vmem>>, vector<16x128xf32>,
    %c0_i32_10 = arith.constant 0 : i32
    %28 = arith.cmpi eq, %arg1, %c0_i32_10 : i32
    %29 = arith.extui %28 : i1 to i32
    %c0_i32_11 = arith.constant 0 : i32
    %30 = arith.cmpi ne, %29, %c0_i32_11 : i32
    scf.if %30 {
      %c0_12 = arith.constant 0 : index
      %c0_13 = arith.constant 0 : index
      %31 = vector.load %arg6[%c0_12, %c0_13] : memref<16x128xf32, #tpu.memory_space<vmem>>, vector<16x128xf32>
      %32 = vector.shape_cast %31 : vector<16x128xf32> to vector<1x16x128xf32>
      %cst_14 = arith.constant dense<0.000000e+00> : vector<1xf32>
      %33 = vector.multi_reduction <add>, %32, %cst_14 [1, 2] : vector<1x16x128xf32> to vector<1xf32>
      %34 = vector.shape_cast %33 : vector<1xf32> to vector<1x1x1xf32>
      %35 = vector.extract %34[0, 0, 0] : f32 from vector<1x1x1xf32>
      %36 = vector.broadcast %35 : f32 to vector<1x1x1xf32>
      %c0_15 = arith.constant 0 : index
      %c0_16 = arith.constant 0 : index
      %c0_17 = arith.constant 0 : index
      %37 = vector.load %arg5[%c0_15, %c0_16, %c0_17] : memref<1x1x1xf32, #tpu.memory_space<vmem>>, vector<1x1x1xf32>
      tpu.vector_store %arg5[%c0_15, %c0_16, %c0_17], %36 {strides = array<i32>} : memref<1x1x1xf32, #tpu.memory_space<vmem>>, vector<1x1x1xf32>,
    } else {
    }
    return
  }
  func.func @transform_0(%arg0: i32, %arg1: i32, %arg2: memref<1xi32, #tpu.memory_space<smem>>) -> (i32, i32) {
    %c1_i32 = arith.constant 1 : i32
    %0 = arith.muli %arg0, %c1_i32 : i32
    %1 = arith.addi %0, %arg1 : i32
    %c0_i32 = arith.constant 0 : i32
    %2 = arith.minsi %1, %c0_i32 : i32
    %c0_i32_0 = arith.constant 0 : i32
    %c0_i32_1 = arith.constant 0 : i32
    return %2, %c0_i32_0 : i32, i32
  }
  func.func @transform_1(%arg0: i32, %arg1: i32, %arg2: memref<1xi32, #tpu.memory_space<smem>>) -> (i32, i32) {
    %c1_i32 = arith.constant 1 : i32
    %0 = arith.muli %arg0, %c1_i32 : i32
    %1 = arith.addi %0, %arg1 : i32
    %c0_i32 = arith.constant 0 : i32
    %2 = arith.minsi %1, %c0_i32 : i32
    %c0_i32_0 = arith.constant 0 : i32
    %c0_i32_1 = arith.constant 0 : i32
    return %2, %c0_i32_0 : i32, i32
  }
  func.func @transform_2(%arg0: i32, %arg1: i32, %arg2: memref<1xi32, #tpu.memory_space<smem>>) -> (i32, i32, i32) {
    %c0_i32 = arith.constant 0 : i32
    %c0_i32_0 = arith.constant 0 : i32
    %c0_i32_1 = arith.constant 0 : i32
    return %arg0, %c0_i32, %c0_i32_0 : i32, i32, i32
  }
}

</mosaic_0001>

<llo_original>
// kernel: tpu_custom_call.1
$region0: #{tpu_custom_call.1}
  #allocation0 [shape = 'u32[]', space=smem, size = 0x4, offset = 0x4, fixed_abs, tag = 'smem constant byte address 0x4 - core index']
  #allocation1 [shape = 'u32[144,128]{1,0:T(1,128)}', space=vmem, size = 0x12000, scoped, tag = 'internal scratch']
  #allocation2 [shape = 'f32[16,128]{1,0:T(8,128)}', space=vmem, size = 0x2000, scoped, tag = 'scratch operand']
  #allocation3 [shape = 's32[1]{0}', space=sflag, size = 0x4, scoped, tag = 'scoped memory for tpu_custom_call.1']
  #allocation4 [shape = 's32[1]{0:T(128)S(6)}', space=smem, size = 0x200, scoped, tag = 'prefetched SMEM operand 0']
  %s0 = inlined_call_operand.<no memory space> [shape: s32[1], index: 0, kind: input, shape index: {}]
  %s1 = inlined_call_operand.hbm [shape: f32[16,128], index: 1, kind: input, shape index: {}]
  %s2 = inlined_call_operand.hbm [shape: f32[16,128], index: 2, kind: input, shape index: {}]
  %s3 = inlined_call_operand.vmem [shape: f32[2,1,1], index: 3, kind: output, shape index: {}]
  %s4 = sld [smem:[#allocation0]]
  $region57: #{tpu_custom_call.1} parent=0
    _
  %s6 = ssub.s32 1, %s4
  %s7 = scalar_select 0, %s6, %s4
  %8 = sst [smem:[#allocation4]] %s0
  $region1: #{tpu_custom_call.1} parent=0
    #allocation5 [shape = 'u8[16384]{0}', space=vmem, size = 0x4000, scoped, tag = 'input window, operand 1']
    #allocation6 [shape = 's32[2]{0}', space=sflag, size = 0x8, scoped, tag = 'scoped memory for tpu_custom_call.1']
    #allocation7 [shape = 'u8[16384]{0}', space=vmem, size = 0x4000, scoped, tag = 'input window, operand 2']
    #allocation8 [shape = 's32[2]{0}', space=sflag, size = 0x8, scoped, tag = 'scoped memory for tpu_custom_call.1']
    %9 = vsyncpa [#allocation6], 0
    %s10 = scalar_lea.sflag [#allocation6], 1
    %11 = vsyncpa %s10, 0
    %12 = vsyncpa [#allocation8], 0
    %s13 = scalar_lea.sflag [#allocation8], 1
    %14 = vsyncpa %s13, 0
    loop: start=0, step=1, limit=4
    $region2: #{tpu_custom_call.1} parent=1 // loop_pre_header
      _
    $region3: #{tpu_custom_call.1} parent=1 // loop_header
      %s16 = sphi 0, %s20
      %p17 = scmp.ge.s32.totalorder %s16, 4
      %s23 = sphi 0, %s35
      %s24 = sphi 0, %s31
      %s25 = sphi 0, %s23
      %s26 = sphi 0, %s24
      %s27 = sphi 0, %s25
      %s28 = sphi 0, %s26
      %s44 = sphi 0, %s46
      %s47 = sphi 0, %s44
      %s48 = sphi 0, %s47
      %s64 = sphi 0, %s48
      %s76 = sphi 0, %s78
      %s79 = sphi 0, %s76
      %s80 = sphi 0, %s79
      %s96 = sphi 0, %s80
      %s102 = sphi 0, %s104
      %s105 = sphi 0, %s102
      %s106 = sphi 0, %s105
      %s122 = sphi 0, %s106
    $region4: #{tpu_custom_call.1} parent=1 // loop_header_branch
      %19 = sbr.rel (%p17) target = $region8
    $region5: #{tpu_custom_call.1} parent=1 // loop_body
      %s21 = ssub.s32 %s16, 1
      %s22 = ssub.s32 %s16, 2
      %s29 = sadd.s32 1, %s24
      %p30 = scmp.ge.s32.totalorder %s29, 1
      %s31 = scalar_select %p30, 0, %s29
      %s32 = sadd.s32 1, %s23
      %s33 = scalar_select %p30, %s32, %s23
      %p34 = scmp.ge.s32.totalorder %s33, 2
      %s35 = scalar_select %p34, 0, %s33
      %s36 = sadd.s32 %s23, %s24
      %p37 = scmp.lt.s32.totalorder %s36, 0
      %s38 = scalar_select %p37, %s36, 0
      %s39 = sadd.s32 %s35, %s31
      %p40 = scmp.lt.s32.totalorder %s39, 0
      %s41 = scalar_select %p40, %s39, 0
      %s42 = ssub.s32 %s38, %s41
      %p43 = scmp.eq.s32.totalorder %s42, 0
      %s45 = sadd.s32 %s44, 1
      %s46 = scalar_select %p43, %s44, %s45
      %p49 = pneg %p43
      %p50 = scmp.eq.s32.totalorder %s16, 1
      %p51 = por %p49, %p50
      %p52 = scmp.ne.s32.totalorder %s44, %s47
      %p53 = scmp.eq.s32.totalorder %s16, 0
      %p54 = por %p52, %p53
      %p55 = scmp.ne.s32.totalorder %s44, %s47
      %p56 = scmp.eq.s32.totalorder %s21, 1
      %p57 = por %p55, %p56
      %p58 = scmp.ne.s32.totalorder %s47, %s48
      %p59 = scmp.eq.s32.totalorder %s21, 0
      %p60 = por %p58, %p59
      %p61 = scmp.ne.s32.totalorder %s47, %s48
      %p62 = scmp.eq.s32.totalorder %s22, 1
      %p63 = por %p61, %p62
      %p65 = scmp.ne.s32.totalorder %s48, %s64
      %p66 = scmp.eq.s32.totalorder %s22, 0
      %p67 = por %p65, %p66
      %s68 = sadd.s32 %s23, %s24
      %p69 = scmp.lt.s32.totalorder %s68, 0
      %s70 = scalar_select %p69, %s68, 0
      %s71 = sadd.s32 %s35, %s31
      %p72 = scmp.lt.s32.totalorder %s71, 0
      %s73 = scalar_select %p72, %s71, 0
      %s74 = ssub.s32 %s70, %s73
      %p75 = scmp.eq.s32.totalorder %s74, 0
      %s77 = sadd.s32 %s76, 1
      %s78 = scalar_select %p75, %s76, %s77
      %p81 = pneg %p75
      %p82 = scmp.eq.s32.totalorder %s16, 1
      %p83 = por %p81, %p82
      %p84 = scmp.ne.s32.totalorder %s76, %s79
      %p85 = scmp.eq.s32.totalorder %s16, 0
      %p86 = por %p84, %p85
      %p87 = scmp.ne.s32.totalorder %s76, %s79
      %p88 = scmp.eq.s32.totalorder %s21, 1
      %p89 = por %p87, %p88
      %p90 = scmp.ne.s32.totalorder %s79, %s80
      %p91 = scmp.eq.s32.totalorder %s21, 0
      %p92 = por %p90, %p91
      %p93 = scmp.ne.s32.totalorder %s79, %s80
      %p94 = scmp.eq.s32.totalorder %s22, 1
      %p95 = por %p93, %p94
      %p97 = scmp.ne.s32.totalorder %s80, %s96
      %p98 = scmp.eq.s32.totalorder %s22, 0
      %p99 = por %p97, %p98
      %s100 = ssub.s32 %s23, %s35
      %p101 = scmp.eq.s32.totalorder %s100, 0
      %s103 = sadd.s32 %s102, 1
      %s104 = scalar_select %p101, %s102, %s103
      %p107 = pneg %p101
      %p108 = scmp.eq.s32.totalorder %s16, 1
      %p109 = por %p107, %p108
      %p110 = scmp.ne.s32.totalorder %s102, %s105
      %p111 = scmp.eq.s32.totalorder %s16, 0
      %p112 = por %p110, %p111
      %p113 = scmp.ne.s32.totalorder %s102, %s105
      %p114 = scmp.eq.s32.totalorder %s21, 1
      %p115 = por %p113, %p114
      %p116 = scmp.ne.s32.totalorder %s105, %s106
      %p117 = scmp.eq.s32.totalorder %s21, 0
      %p118 = por %p116, %p117
      %p119 = scmp.ne.s32.totalorder %s105, %s106
      %p120 = scmp.eq.s32.totalorder %s22, 1
      %p121 = por %p119, %p120
      %p123 = scmp.ne.s32.totalorder %s106, %s122
      %p124 = scmp.eq.s32.totalorder %s22, 0
      %p125 = por %p123, %p124
      %p126 = scmp.le.s32.totalorder 1, %s16
      %p127 = scmp.lt.s32.totalorder %s16, 3
      %p128 = pnand %p126, %p127
      %p129 = pneg %p128
      // Predicated region
      $region9: #{tpu_custom_call.1} parent=5 // pred_check
        _
      $region10: #{tpu_custom_call.1} parent=5 // pred_check_branch
        %131 = sbr.rel (%p128) target = $region12
      $region11: #{tpu_custom_call.1} parent=5 // pred_region
        %s132 = ssub.s32 %s16, 1
      $region12: #{tpu_custom_call.1} parent=5 // pred_fallthru
        _
      %p133 = scmp.lt.s32.totalorder %s16, 2
      // Predicated region
      $region13: #{tpu_custom_call.1} parent=5 // pred_check
        %p134 = pneg %p133
      $region14: #{tpu_custom_call.1} parent=5 // pred_check_branch
        %136 = sbr.rel (%p134) target = $region16
      $region15: #{tpu_custom_call.1} parent=5 // pred_region
        // Predicated region
        $region17: #{tpu_custom_call.1} parent=15 // pred_check
          %p137 = pneg %p54
        $region18: #{tpu_custom_call.1} parent=15 // pred_check_branch
          %139 = sbr.rel (%p137) target = $region20
        $region19: #{tpu_custom_call.1} parent=15 // pred_region
          %s140 = sand.u32 %s44, 1
          %s141 = scalar_lea.sflag [#allocation6], %s140
          %s142 = sand.u32 %s44, 1
          %s143 = smul.addr %s142, 16
          %s144 = scalar_lea.vmem [#allocation5], %s143
          %s145 = sadd.s32 %s23, %s24
          %p146 = scmp.lt.s32.totalorder %s145, 0
          %s147 = scalar_select %p146, %s145, 0
          %s148 = smul.u32 2, %s147
          %s150 = ssub.s32 256, 256
          %151 = vsyncadd %s141, %s150
          %s152 = smul.addr %s148, 128
          %s153 = scalar_lea.hbm %s1, %s152
          %s154 = sshll.u32 %s144, 4
          %s155 = int_to_ptr.vmem [resolvable:$true] %s154
          %160 = dma.hbm_to_vmem [thread:$0]  %s153, 256, %s155, %s141, 128, 128, 8
        $region20: #{tpu_custom_call.1} parent=15 // pred_fallthru
          _
        // Predicated region
        $region21: #{tpu_custom_call.1} parent=15 // pred_check
          %p161 = pneg %p86
        $region22: #{tpu_custom_call.1} parent=15 // pred_check_branch
          %163 = sbr.rel (%p161) target = $region24
        $region23: #{tpu_custom_call.1} parent=15 // pred_region
          %s164 = sand.u32 %s76, 1
          %s165 = scalar_lea.sflag [#allocation8], %s164
          %s166 = sand.u32 %s76, 1
          %s167 = smul.addr %s166, 16
          %s168 = scalar_lea.vmem [#allocation7], %s167
          %s169 = sadd.s32 %s23, %s24
          %p170 = scmp.lt.s32.totalorder %s169, 0
          %s171 = scalar_select %p170, %s169, 0
          %s172 = smul.u32 2, %s171
          %s174 = ssub.s32 256, 256
          %175 = vsyncadd %s165, %s174
          %s176 = smul.addr %s172, 128
          %s177 = scalar_lea.hbm %s2, %s176
          %s178 = sshll.u32 %s168, 4
          %s179 = int_to_ptr.vmem [resolvable:$true] %s178
          %184 = dma.hbm_to_vmem [thread:$0]  %s177, 256, %s179, %s165, 128, 128, 8
        $region24: #{tpu_custom_call.1} parent=15 // pred_fallthru
          _
      $region16: #{tpu_custom_call.1} parent=5 // pred_fallthru
        _
      %p185 = scmp.le.s32.totalorder 1, %s16
      %p186 = scmp.lt.s32.totalorder %s16, 3
      %p187 = pnand %p185, %p186
      %p188 = pneg %p187
      // Predicated region
      $region25: #{tpu_custom_call.1} parent=5 // pred_check
        _
      $region26: #{tpu_custom_call.1} parent=5 // pred_check_branch
        %190 = sbr.rel (%p187) target = $region28
      $region27: #{tpu_custom_call.1} parent=5 // pred_region
        %s191 = ssub.s32 %s16, 1
        %s192 = sand.u32 %s47, 1
        %s193 = scalar_lea.sflag [#allocation6], %s192
        %s194 = sand.u32 %s47, 1
        %s195 = smul.addr %s194, 16
        %s196 = scalar_lea.vmem [#allocation5], %s195
        // Predicated region
        $region29: #{tpu_custom_call.1} parent=27 // pred_check
          %p197 = pneg %p60
        $region30: #{tpu_custom_call.1} parent=27 // pred_check_branch
          %199 = sbr.rel (%p197) target = $region32
        $region31: #{tpu_custom_call.1} parent=27 // pred_region
          %200 = dma.done %s193, 256
        $region32: #{tpu_custom_call.1} parent=27 // pred_fallthru
          _
        %s201 = sand.u32 %s79, 1
        %s202 = scalar_lea.sflag [#allocation8], %s201
        %s203 = sand.u32 %s79, 1
        %s204 = smul.addr %s203, 16
        %s205 = scalar_lea.vmem [#allocation7], %s204
        // Predicated region
        $region33: #{tpu_custom_call.1} parent=27 // pred_check
          %p206 = pneg %p92
        $region34: #{tpu_custom_call.1} parent=27 // pred_check_branch
          %208 = sbr.rel (%p206) target = $region36
        $region35: #{tpu_custom_call.1} parent=27 // pred_region
          %209 = dma.done %s202, 256
        $region36: #{tpu_custom_call.1} parent=27 // pred_fallthru
          _
        %s210 = sand.u32 %s47, 1
        %s211 = scalar_lea.sflag [#allocation6], %s210
        %s212 = sand.u32 %s47, 1
        %s213 = smul.addr %s212, 16
        %s214 = scalar_lea.vmem [#allocation5], %s213
        %p215 = pneg %p60
        %p216 = pneg %p57
        %s217 = sand.u32 %s79, 1
        %s218 = scalar_lea.sflag [#allocation8], %s217
        %s219 = sand.u32 %s79, 1
        %s220 = smul.addr %s219, 16
        %s221 = scalar_lea.vmem [#allocation7], %s220
        %p222 = pneg %p92
        %p223 = pneg %p89
        %p224 = pneg %p118
        %p225 = pneg %p115
        %p226 = scmp.lt.s32.totalorder %s25, 1
        %s227 = scalar_select %p226, %s25, 1
        %s228 = scalar_lea.vmem %s3, %s227
        %s229 = sadd.s32 %s25, %s26
        %p230 = scmp.lt.s32.totalorder %s229, 0
        %s231 = scalar_select %p230, %s229, 0
        %s232 = smul.u32 2, %s231
        %s233 = sadd.s32 %s25, %s26
        %p234 = scmp.lt.s32.totalorder %s233, 0
        %s235 = scalar_select %p234, %s233, 0
        %s236 = smul.u32 2, %s235
        %p237 = scmp.lt.s32.totalorder %s25, 1
        %s238 = scalar_select %p237, %s25, 1
        %s239 = scalar_lea.vmem %s3, %s238
        %p240 = scmp.eq.s32.totalorder %s26, 0
        // Predicated region
        $region37: #{tpu_custom_call.1} parent=27 // pred_check
          %p241 = pneg %p240
        $region38: #{tpu_custom_call.1} parent=27 // pred_check_branch
          %243 = sbr.rel (%p241) target = $region40
        $region39: #{tpu_custom_call.1} parent=27 // pred_region
          %244 = vst [vmem:[#allocation2] sm:$0xff] 0.0
          %245 = vst [vmem:[#allocation2 + $0x8] sm:$0xff] 0.0
        $region40: #{tpu_custom_call.1} parent=27 // pred_fallthru
          _
        %s246 = sadd.s32 %s25, %s26
        %s247 = smul.u32 %s246, 16
        %v248 = vlaneseq
        %v249 = vshrl.u32 %v248, 7
        %v250 = vadd.s32 %v249, 8
        %v251 = vlaneseq
        %v252 = vand.u32 %v251, 127
        %v253 = vstv %s247
        %v254 = vadd.s32 %v253, %v249
        %v255 = vadd.s32 %v253, %v250
        %v256 = vmul.u32 %v254, 128
        %v257 = vmul.u32 %v255, 128
        %v258 = vadd.s32 %v256, %v252
        %v259 = vadd.s32 %v257, %v252
        %s260 = sld [smem:[#allocation4]]
        %v261 = vstv %s260
        %vm262 = vcmp.lt.s32.totalorder %v258, %v261
        %vm263 = vcmp.lt.s32.totalorder %v259, %v261
        %v264 = vld [vmem:[%s196] sm:$0xff]
        %v265 = vld [vmem:[%s196 + $0x8] sm:$0xff]
        %v266 = vld [vmem:[%s205] sm:$0xff]
        %v267 = vld [vmem:[%s205 + $0x8] sm:$0xff]
        %v268 = vsub.f32 %v264, %v266
        %v269 = vsub.f32 %v265, %v267
        %v270 = vmul.f32 %v268, %v268
        %v271 = vmul.f32 %v269, %v269
        %v272 = vadd.f32 %v270, 1e-06
        %v273 = vadd.f32 %v271, 1e-06
        %v274 = vrsqrt.pop %v272
        %v275 = vmul.f32 %v272, %v274
        %vm276 = vcmp.eq.f32.partialorder %v272, inf
        %v277 = vsel %vm276, %v272, %v275
        %vm278 = vcmp.eq.f32.partialorder %v272, 0.0
        %v279 = vand.u32 %v272, 2147483648
        %v280 = vsel %vm278, %v279, %v277
        %v281 = vrsqrt.pop %v273
        %v282 = vmul.f32 %v273, %v281
        %vm283 = vcmp.eq.f32.partialorder %v273, inf
        %v284 = vsel %vm283, %v273, %v282
        %vm285 = vcmp.eq.f32.partialorder %v273, 0.0
        %v286 = vand.u32 %v273, 2147483648
        %v287 = vsel %vm285, %v286, %v284
        %v288 = vld [vmem:[#allocation2] sm:$0xff]
        %v289 = vld [vmem:[#allocation2 + $0x8] sm:$0xff]
        %v290 = vsel %vm262, %v280, 0.0
        %v291 = vsel %vm263, %v287, 0.0
        %v292 = vadd.f32 %v288, %v290
        %v293 = vadd.f32 %v289, %v291
        %294 = vst [vmem:[#allocation2] sm:$0xff] %v292
        %295 = vst [vmem:[#allocation2 + $0x8] sm:$0xff] %v293
        // Predicated region
        $region41: #{tpu_custom_call.1} parent=27 // pred_check
          %p296 = pneg %p240
        $region42: #{tpu_custom_call.1} parent=27 // pred_check_branch
          %298 = sbr.rel (%p296) target = $region44
        $region43: #{tpu_custom_call.1} parent=27 // pred_region
          %v299 = vld [vmem:[#allocation2] sm:$0xff]
          %v300 = vld [vmem:[#allocation2 + $0x8] sm:$0xff]
          %v301 = vadd.f32 %v299, %v300
          %302 = vadd.xlane.f32.xlu0 %v301
          %v303 = vpop.xlane.xlu0 %302
          %v304 = vrot.slane %v303, 4
          %v305 = vadd.f32 %v303, %v304
          %v306 = vrot.slane %v305, 2
          %v307 = vadd.f32 %v305, %v306
          %v308 = vrot.slane %v307, 1
          %v309 = vadd.f32 %v307, %v308
          %s310 = vtos %v309
          %v311 = vstv %s310
          %vm312 = vcmask 0
          %313 = vst.msk [vmem:[%s239] sm:$0x1] %vm312, %v311
        $region44: #{tpu_custom_call.1} parent=27 // pred_fallthru
          _
        %p314 = scmp.lt.s32.totalorder %s25, 1
        %s315 = scalar_select %p314, %s25, 1
        %s316 = scalar_lea.vmem %s3, %s315
        // Predicated region
        $region45: #{tpu_custom_call.1} parent=27 // pred_check
          %p317 = pneg %p115
        $region46: #{tpu_custom_call.1} parent=27 // pred_check_branch
          %319 = sbr.rel (%p317) target = $region48
        $region47: #{tpu_custom_call.1} parent=27 // pred_region
          _
        $region48: #{tpu_custom_call.1} parent=27 // pred_fallthru
          _
      $region28: #{tpu_custom_call.1} parent=5 // pred_fallthru
        _
      %p320 = scmp.le.s32.totalorder 2, %s16
      // Predicated region
      $region49: #{tpu_custom_call.1} parent=5 // pred_check
        %p321 = pneg %p320
      $region50: #{tpu_custom_call.1} parent=5 // pred_check_branch
        %323 = sbr.rel (%p321) target = $region52
      $region51: #{tpu_custom_call.1} parent=5 // pred_region
        %s324 = ssub.s32 %s16, 2
        // Predicated region
        $region53: #{tpu_custom_call.1} parent=51 // pred_check
          %p325 = pneg %p121
        $region54: #{tpu_custom_call.1} parent=51 // pred_check_branch
          %327 = sbr.rel (%p325) target = $region56
        $region55: #{tpu_custom_call.1} parent=51 // pred_region
          %p328 = scmp.lt.s32.totalorder %s27, 1
          %s329 = scalar_select %p328, %s27, 1
          %s330 = scalar_lea.vmem %s3, %s329
        $region56: #{tpu_custom_call.1} parent=51 // pred_fallthru
          _
      $region52: #{tpu_custom_call.1} parent=5 // pred_fallthru
        _
    $region6: #{tpu_custom_call.1} parent=1 // loop_footer
      %s20 = sadd.s32 1, %s16
    $region7: #{tpu_custom_call.1} parent=1 // loop_footer_branch
      %15 = sbr.rel target = $region3
    $region8: #{tpu_custom_call.1} parent=1 // loop_exit
      _
    %331 = vsyncpa [#allocation6], 1
    %s332 = scalar_lea.sflag [#allocation6], 1
    %333 = vsyncpa %s332, 1
    %334 = vsyncpa [#allocation8], 1
    %s335 = scalar_lea.sflag [#allocation8], 1
    %336 = vsyncpa %s335, 1

</llo_original>
